<compile_context>
chip_gen: v5e
topology: v5e:2x2
jax: 0.10.0
libtpu: 0.0.40
codegen_flags: <defaults>
</compile_context>

<pallas_src>
import math

import jax
import jax.numpy as jnp
from jax.experimental import pallas as pl
from jax.experimental.pallas import tpu as pltpu


# ----------------------------------------------------------------------------
# Schedule (matches Diffuser._cosine_variance_schedule)
# ----------------------------------------------------------------------------
def cosine_variance_schedule(timesteps: int, epsilon: float = 0.008):
    steps = jnp.linspace(0.0, float(timesteps), timesteps + 1, dtype=jnp.float32)
    f_t = jnp.cos((steps / timesteps + epsilon) / (1.0 + epsilon) * math.pi * 0.5) ** 2
    betas = jnp.clip(1.0 - f_t[1:] / f_t[:timesteps], 0.0, 0.999)
    return betas


# ----------------------------------------------------------------------------
# Pallas kernel: x_t = sa * x + s1m * noise   (sa/s1m broadcast per sample row)
# ----------------------------------------------------------------------------
def _forward_diffusion_kernel(sa_ref, s1m_ref, x_ref, n_ref, o_ref):
    # sa_ref / s1m_ref : (TB, 1)   per-sample scalars, broadcast along lanes.
    # x_ref / n_ref / o_ref : (TB, TC) lane-dense data blocks.
    o_ref[...] = sa_ref[...] * x_ref[...] + s1m_ref[...] * n_ref[...]


_LANE = 128
_TARGET_BLOCK_ELEMS = 1 << 20   # ~4 MiB of f32 per data buffer
_MIN_GRID_STEPS = 4             # keep both v7x TensorCores busy on big inputs


def _pick_tiling(B: int, D: int):
    """Pick (TB, TC) = (batch rows, lane-dense columns) per block.

    Block-shape validity for a (B, D) array: TB % 8 == 0 or TB == B, and
    TC % 128 == 0 or TC == D.  The array extents need NOT divide the block
    shape -- Pallas pads partial edge blocks on read and drops OOB writes.
    """
    # Batch rows per block.
    if B <= 8:
        TB = B
    else:
        rows = _TARGET_BLOCK_ELEMS // max(D, 1)
        TB = min(B, max(8, (rows // 8) * 8))

    # Lane-dense columns per block.
    cols = max(_LANE, _TARGET_BLOCK_ELEMS // TB)
    TC = D if cols >= D else (cols // _LANE) * _LANE

    # Megacore (v7x): for big inputs make sure there are >= _MIN_GRID_STEPS
    # grid steps so both TensorCores get work.  Only shrink TB in ways that
    # keep it a valid block dim (halving a multiple of 16 stays a multiple of 8).
    if B * D >= _MIN_GRID_STEPS * _TARGET_BLOCK_ELEMS:
        while (pl.cdiv(B, TB) * pl.cdiv(D, TC) < _MIN_GRID_STEPS) and TB % 16 == 0:
            TB //= 2
    return TB, TC


def forward_diffusion_pallas(x, noise, t, sqrt_ac, sqrt_1m_ac,
                             *, block_rows=None, block_cols=None):
    """x, noise: (B, C, H, W) float32.  t: (B,) int32.  Returns x_t (B,C,H,W)."""
    B = x.shape[0]
    D = 1
    for s in x.shape[1:]:
        D *= int(s)

    TB, TC = _pick_tiling(B, D)
    if block_rows is not None:
        TB = block_rows
    if block_cols is not None:
        TC = block_cols
    assert TB == B or TB % 8 == 0, "block rows must be a multiple of 8 or == B"
    assert TC == D or TC % _LANE == 0, "block cols must be a multiple of 128 or == D"

    # Free (contiguous) reshapes -- no extra HBM passes.
    xf = x.reshape(B, D)
    nf = noise.reshape(B, D)

    # Per-sample scalars, gathered once in plain JAX (B elements each).
    sa = sqrt_ac[t].astype(x.dtype).reshape(B, 1)
    s1m = sqrt_1m_ac[t].astype(x.dtype).reshape(B, 1)

    grid = (pl.cdiv(B, TB), pl.cdiv(D, TC))

    out = pl.pallas_call(
        _forward_diffusion_kernel,
        out_shape=jax.ShapeDtypeStruct((B, D), x.dtype),
        grid=grid,
        in_specs=[
            pl.BlockSpec((TB, 1), lambda b, c: (b, 0)),     # sqrt(alphas_cumprod[t])
            pl.BlockSpec((TB, 1), lambda b, c: (b, 0)),     # sqrt(1 - alphas_cumprod[t])
            pl.BlockSpec((TB, TC), lambda b, c: (b, c)),    # x_0
            pl.BlockSpec((TB, TC), lambda b, c: (b, c)),    # noise
        ],
        out_specs=pl.BlockSpec((TB, TC), lambda b, c: (b, c)),
        compiler_params=pltpu.CompilerParams(
            dimension_semantics=("parallel", "parallel"),
            vmem_limit_bytes=48 * 1024 * 1024),
    )(sa, s1m, xf, nf)

    return out.reshape(x.shape)


# ----------------------------------------------------------------------------
# Diffuser (JAX side).  Buffers are built exactly like the PyTorch __init__.
# ----------------------------------------------------------------------------
class Diffuser:
    def __init__(self, image_size, in_channels, time_embedding_dim, timesteps,
                 label, base_dim, dim_mults):
        self.timesteps = timesteps
        self.label = label
        self.in_channels = in_channels
        self.image_size = image_size
        self.base_dim = base_dim
        self.dim_mults = dim_mults

        betas = cosine_variance_schedule(timesteps)
        alphas = 1.0 - betas
        alphas_cumprod = jnp.cumprod(alphas, axis=-1)
        self.betas = betas
        self.alphas = alphas
        self.alphas_cumprod = alphas_cumprod
        self.sqrt_alphas_cumprod = jnp.sqrt(alphas_cumprod)
        self.sqrt_one_minus_alphas_cumprod = jnp.sqrt(1.0 - alphas_cumprod)

        # TODO(synk): the Unet denoiser (`self.model`) is not defined in the
        # provided source, so the model(x_t, t, l) call cannot be reproduced;
        # forward() returns the Pallas-computed forward-diffused sample x_t.

    def forward(self, x, noise, l, key):
        # torch.randint(0, timesteps, (B,)) -> JAX equivalent (different RNG
        # stream than torch, but same semantics: uniform integer timestep).
        t = jax.random.randint(key, (x.shape[0],), 0, self.timesteps,
                               dtype=jnp.int32)
        x_t = forward_diffusion_pallas(
            x, noise, t,
            self.sqrt_alphas_cumprod, self.sqrt_one_minus_alphas_cumprod)
        return x_t, t


# ----------------------------------------------------------------------------
# Pure-JAX reference for correctness check
# ----------------------------------------------------------------------------
def _forward_diffusion_ref(x, noise, t, sqrt_ac, sqrt_1m_ac):
    sa = sqrt_ac[t].reshape(-1, 1, 1, 1)
    s1m = sqrt_1m_ac[t].reshape(-1, 1, 1, 1)
    return sa * x + s1m * noise


if __name__ == "__main__":
    timesteps = 100
    key = jax.random.PRNGKey(0)

    # ---- main small, module-consistent test: batch=2, channels=4, spatial=16
    B, C, H, W = 2, 4, 16, 16
    diffuser = Diffuser(image_size=H, in_channels=C, time_embedding_dim=32,
                        timesteps=timesteps, label=10, base_dim=32,
                        dim_mults=(1, 2))

    kx, kn, kl, kt = jax.random.split(key, 4)
    x = jax.random.normal(kx, (B, C, H, W), dtype=jnp.float32)
    noise = jax.random.normal(kn, (B, C, H, W), dtype=jnp.float32)
    l = jax.random.randint(kl, (B,), 0, 10, dtype=jnp.int32)

    x_t, t = diffuser.forward(x, noise, l, kt)
    x_t = jax.block_until_ready(x_t)

    ref = _forward_diffusion_ref(x, noise, t,
                                 diffuser.sqrt_alphas_cumprod,
                                 diffuser.sqrt_one_minus_alphas_cumprod)
    assert x_t.shape == (B, C, H, W)
    assert jnp.allclose(x_t, ref, atol=1e-6, rtol=1e-6), "mismatch vs reference"

    # ---- test 2: D = C*H*W not a multiple of 128 (full-row block, no padding)
    B2, C2, H2, W2 = 3, 1, 28, 28
    k2x, k2n, k2t = jax.random.split(jax.random.PRNGKey(1), 3)
    x2 = jax.random.normal(k2x, (B2, C2, H2, W2), dtype=jnp.float32)
    n2 = jax.random.normal(k2n, (B2, C2, H2, W2), dtype=jnp.float32)
    t2 = jax.random.randint(k2t, (B2,), 0, timesteps, dtype=jnp.int32)
    out2 = forward_diffusion_pallas(
        x2, n2, t2,
        diffuser.sqrt_alphas_cumprod, diffuser.sqrt_one_minus_alphas_cumprod)
    out2 = jax.block_until_ready(out2)
    ref2 = _forward_diffusion_ref(x2, n2, t2,
                                  diffuser.sqrt_alphas_cumprod,
                                  diffuser.sqrt_one_minus_alphas_cumprod)
    assert jnp.allclose(out2, ref2, atol=1e-6, rtol=1e-6), "full-row path mismatch"

    # ---- test 3: partial edge blocks (B % TB != 0) + column chunking,
    #      forced at small scale via block overrides.
    B3, C3, H3, W3 = 10, 1, 16, 16          # D = 256
    k3x, k3n, k3t = jax.random.split(jax.random.PRNGKey(2), 3)
    x3 = jax.random.normal(k3x, (B3, C3, H3, W3), dtype=jnp.float32)
    n3 = jax.random.normal(k3n, (B3, C3, H3, W3), dtype=jnp.float32)
    t3 = jax.random.randint(k3t, (B3,), 0, timesteps, dtype=jnp.int32)
    out3 = forward_diffusion_pallas(
        x3, n3, t3,
        diffuser.sqrt_alphas_cumprod, diffuser.sqrt_one_minus_alphas_cumprod,
        block_rows=8, block_cols=128)        # grid = (2, 2), last batch block partial
    out3 = jax.block_until_ready(out3)
    ref3 = _forward_diffusion_ref(x3, n3, t3,
                                  diffuser.sqrt_alphas_cumprod,
                                  diffuser.sqrt_one_minus_alphas_cumprod)
    assert jnp.allclose(out3, ref3, atol=1e-6, rtol=1e-6), "partial-block mismatch"

    print("KERNEL_OK")
</pallas_src>

<mosaic_0001>
module attributes {stable_mosaic.version = 11 : i64} {
  func.func @_forward_diffusion_kernel(%arg0: i32, %arg1: i32, %arg2: memref<2x1xf32, #tpu.memory_space<vmem>>, %arg3: memref<2x1xf32, #tpu.memory_space<vmem>>, %arg4: memref<2x1024xf32, #tpu.memory_space<vmem>>, %arg5: memref<2x1024xf32, #tpu.memory_space<vmem>>, %arg6: memref<2x1024xf32, #tpu.memory_space<vmem>>) attributes {dimension_semantics = [#tpu.dimension_semantics<parallel>, #tpu.dimension_semantics<parallel>], iteration_bounds = array<i64: 1, 1>, scalar_prefetch = 0 : i64, scratch_operands = 0 : i64, tpu.core_type = #tpu.core_type<tc>, window_params = [{transform_indices = @transform_0, window_bounds = array<i64: 2, 1>}, {transform_indices = @transform_1, window_bounds = array<i64: 2, 1>}, {transform_indices = @transform_2, window_bounds = array<i64: 2, 1024>}, {transform_indices = @transform_3, window_bounds = array<i64: 2, 1024>}, {transform_indices = @transform_4, window_bounds = array<i64: 2, 1024>}]} {
    %c0 = arith.constant 0 : index
    %c0_0 = arith.constant 0 : index
    %0 = vector.load %arg2[%c0, %c0_0] : memref<2x1xf32, #tpu.memory_space<vmem>>, vector<2x1xf32>
    %c0_1 = arith.constant 0 : index
    %c0_2 = arith.constant 0 : index
    %1 = vector.load %arg4[%c0_1, %c0_2] : memref<2x1024xf32, #tpu.memory_space<vmem>>, vector<2x1024xf32>
    %2 = vector.broadcast %0 : vector<2x1xf32> to vector<2x1024xf32>
    %3 = arith.mulf %2, %1 : vector<2x1024xf32>
    %c0_3 = arith.constant 0 : index
    %c0_4 = arith.constant 0 : index
    %4 = vector.load %arg3[%c0_3, %c0_4] : memref<2x1xf32, #tpu.memory_space<vmem>>, vector<2x1xf32>
    %c0_5 = arith.constant 0 : index
    %c0_6 = arith.constant 0 : index
    %5 = vector.load %arg5[%c0_5, %c0_6] : memref<2x1024xf32, #tpu.memory_space<vmem>>, vector<2x1024xf32>
    %6 = vector.broadcast %4 : vector<2x1xf32> to vector<2x1024xf32>
    %7 = arith.mulf %6, %5 : vector<2x1024xf32>
    %8 = arith.addf %3, %7 : vector<2x1024xf32>
    %c0_7 = arith.constant 0 : index
    %c0_8 = arith.constant 0 : index
    %9 = vector.load %arg6[%c0_7, %c0_8] : memref<2x1024xf32, #tpu.memory_space<vmem>>, vector<2x1024xf32>
    tpu.vector_store %arg6[%c0_7, %c0_8], %8 {strides = array<i32>} : memref<2x1024xf32, #tpu.memory_space<vmem>>, vector<2x1024xf32>,
    return
  }
  func.func @transform_0(%arg0: i32, %arg1: i32) -> (i32, i32) {
    %c0_i32 = arith.constant 0 : i32
    %c0_i32_0 = arith.constant 0 : i32
    return %arg0, %c0_i32 : i32, i32
  }
  func.func @transform_1(%arg0: i32, %arg1: i32) -> (i32, i32) {
    %c0_i32 = arith.constant 0 : i32
    %c0_i32_0 = arith.constant 0 : i32
    return %arg0, %c0_i32 : i32, i32
  }
  func.func @transform_2(%arg0: i32, %arg1: i32) -> (i32, i32) {
    %c0_i32 = arith.constant 0 : i32
    return %arg0, %arg1 : i32, i32
  }
  func.func @transform_3(%arg0: i32, %arg1: i32) -> (i32, i32) {
    %c0_i32 = arith.constant 0 : i32
    return %arg0, %arg1 : i32, i32
  }
  func.func @transform_4(%arg0: i32, %arg1: i32) -> (i32, i32) {
    %c0_i32 = arith.constant 0 : i32
    return %arg0, %arg1 : i32, i32
  }
}

</mosaic_0001>

<llo_original>
// kernel: tpu_custom_call.1
$region0: #{tpu_custom_call.1}
  #allocation0 [shape = 'u32[]', space=smem, size = 0x4, offset = 0x4, fixed_abs, tag = 'smem constant byte address 0x4 - core index']
  #allocation1 [shape = 'u32[72,128]{1,0:T(1,128)}', space=vmem, size = 0x9000, scoped, tag = 'internal scratch']
  %s0 = inlined_call_operand.vmem [shape: f32[2,1], index: 0, kind: input, shape index: {}]
  %s1 = inlined_call_operand.vmem [shape: f32[2,1], index: 1, kind: input, shape index: {}]
  %s2 = inlined_call_operand.hbm [shape: f32[2,1024], index: 2, kind: input, shape index: {}]
  %s3 = inlined_call_operand.hbm [shape: f32[2,1024], index: 3, kind: input, shape index: {}]
  %s4 = inlined_call_operand.hbm [shape: f32[2,1024], index: 4, kind: output, shape index: {}]
  %s5 = sld [smem:[#allocation0]]
  $region34: #{tpu_custom_call.1} parent=0
    _
  %s7 = ssub.s32 1, %s5
  %s8 = scalar_select 0, %s7, %s5
  $region1: #{tpu_custom_call.1} parent=0
    #allocation2 [shape = 'u8[8192]{0}', space=vmem, size = 0x2000, scoped, tag = 'input window, operand 2, single buffered']
    #allocation3 [shape = 's32[1]{0}', space=sflag, size = 0x4, scoped, tag = 'scoped memory for tpu_custom_call.1']
    #allocation4 [shape = 's32[1]{0}', space=sflag, size = 0x4, scoped, tag = 'scoped memory for tpu_custom_call.1']
    #allocation5 [shape = 'u8[8192]{0}', space=vmem, size = 0x2000, scoped, tag = 'input window, operand 3, single buffered']
    #allocation6 [shape = 's32[1]{0}', space=sflag, size = 0x4, scoped, tag = 'scoped memory for tpu_custom_call.1']
    #allocation7 [shape = 'u8[8192]{0}', space=vmem, size = 0x2000, scoped, tag = 'output window, operand 0, single buffered']
    %9 = vsyncpa [#allocation3], 0
    %10 = vsyncpa [#allocation6], 0
    %11 = vsyncpa [#allocation4], 0
    // Predicated region
    $region2: #{tpu_custom_call.1} parent=1 // pred_check
      _
    $region3: #{tpu_custom_call.1} parent=1 // pred_check_branch
      %13 = sbr.rel (0) target = $region5
    $region4: #{tpu_custom_call.1} parent=1 // pred_region
      _
    $region5: #{tpu_custom_call.1} parent=1 // pred_fallthru
      _
    // Predicated region
    $region6: #{tpu_custom_call.1} parent=1 // pred_check
      _
    $region7: #{tpu_custom_call.1} parent=1 // pred_check_branch
      %15 = sbr.rel (0) target = $region9
    $region8: #{tpu_custom_call.1} parent=1 // pred_region
      _
    $region9: #{tpu_custom_call.1} parent=1 // pred_fallthru
      _
    // Predicated region
    $region10: #{tpu_custom_call.1} parent=1 // pred_check
      _
    $region11: #{tpu_custom_call.1} parent=1 // pred_check_branch
      %17 = sbr.rel (0) target = $region13
    $region12: #{tpu_custom_call.1} parent=1 // pred_region
      %19 = vsyncadd [#allocation3], 0
      %s21 = sshll.u32 %s2, 4
      %s22 = int_to_ptr.hbm [resolvable:$true] %s21
      %s23 = sshll.u32 [#allocation2], 4
      %s24 = int_to_ptr.vmem [resolvable:$true] %s23
      %26 = dma.hbm_to_vmem [thread:$0]  %s22, 256, %s24, [#allocation3]
    $region13: #{tpu_custom_call.1} parent=1 // pred_fallthru
      _
    // Predicated region
    $region14: #{tpu_custom_call.1} parent=1 // pred_check
      _
    $region15: #{tpu_custom_call.1} parent=1 // pred_check_branch
      %28 = sbr.rel (0) target = $region17
    $region16: #{tpu_custom_call.1} parent=1 // pred_region
      %30 = vsyncadd [#allocation6], 0
      %s32 = sshll.u32 %s3, 4
      %s33 = int_to_ptr.hbm [resolvable:$true] %s32
      %s34 = sshll.u32 [#allocation5], 4
      %s35 = int_to_ptr.vmem [resolvable:$true] %s34
      %37 = dma.hbm_to_vmem [thread:$0]  %s33, 256, %s35, [#allocation6]
    $region17: #{tpu_custom_call.1} parent=1 // pred_fallthru
      _
    // Predicated region
    $region18: #{tpu_custom_call.1} parent=1 // pred_check
      _
    $region19: #{tpu_custom_call.1} parent=1 // pred_check_branch
      %39 = sbr.rel (0) target = $region21
    $region20: #{tpu_custom_call.1} parent=1 // pred_region
      %41 = dma.done [#allocation3], 256
    $region21: #{tpu_custom_call.1} parent=1 // pred_fallthru
      _
    // Predicated region
    $region22: #{tpu_custom_call.1} parent=1 // pred_check
      _
    $region23: #{tpu_custom_call.1} parent=1 // pred_check_branch
      %43 = sbr.rel (0) target = $region25
    $region24: #{tpu_custom_call.1} parent=1 // pred_region
      %45 = dma.done [#allocation6], 256
    $region25: #{tpu_custom_call.1} parent=1 // pred_fallthru
      _
    %v46 = vld [vmem:[%s0] sm:$0x3]
    %v47 = vld [vmem:[#allocation2] sm:$0xff]
    %v48 = vld [vmem:[#allocation2 + $0x8] sm:$0xff]
    %50 = vset.pattern.permute.xlu0 0
    %51 = vperm.xlu0 %50, %v46
    %v52 = vpop.permute.xlu0 %51
    %56 = vst [vmem:[#allocation1] ss:$4 sm:$0xff] %v47
    %s57 = scalar_lea.vmem [#allocation1], 32
    %58 = vst [vmem:[%s57] ss:$4 sm:$0xff] %v48
    %v59 = vld.sshfl [vmem:[#allocation1] sm:$0xff pattern:$0x73625140]
    %v60 = vld.sshfl [vmem:[#allocation1 + $0x8] sm:$0xff pattern:$0x73625140]
    %v61 = vld.sshfl [vmem:[#allocation1 + $0x10] sm:$0xff pattern:$0x73625140]
    %v62 = vld.sshfl [vmem:[#allocation1 + $0x18] sm:$0xff pattern:$0x73625140]
    %v63 = vld.sshfl [vmem:[#allocation1 + $0x20] sm:$0xff pattern:$0x73625140]
    %v64 = vld.sshfl [vmem:[#allocation1 + $0x28] sm:$0xff pattern:$0x73625140]
    %v65 = vld.sshfl [vmem:[#allocation1 + $0x30] sm:$0xff pattern:$0x73625140]
    %v66 = vld.sshfl [vmem:[#allocation1 + $0x38] sm:$0xff pattern:$0x73625140]
    %v75 = vmul.f32 %v52, %v59
    %v76 = vmul.f32 %v52, %v60
    %v77 = vmul.f32 %v52, %v61
    %v78 = vmul.f32 %v52, %v62
    %v79 = vmul.f32 %v52, %v63
    %v80 = vmul.f32 %v52, %v64
    %v81 = vmul.f32 %v52, %v65
    %v82 = vmul.f32 %v52, %v66
    %v83 = vld [vmem:[%s1] sm:$0x3]
    %v84 = vld [vmem:[#allocation5] sm:$0xff]
    %v85 = vld [vmem:[#allocation5 + $0x8] sm:$0xff]
    %87 = vset.pattern.permute.xlu0 0
    %88 = vperm.xlu0 %87, %v83
    %v89 = vpop.permute.xlu0 %88
    %93 = vst [vmem:[#allocation1] ss:$4 sm:$0xff] %v84
    %s94 = scalar_lea.vmem [#allocation1], 32
    %95 = vst [vmem:[%s94] ss:$4 sm:$0xff] %v85
    %v96 = vld.sshfl [vmem:[#allocation1] sm:$0xff pattern:$0x73625140]
    %v97 = vld.sshfl [vmem:[#allocation1 + $0x8] sm:$0xff pattern:$0x73625140]
    %v98 = vld.sshfl [vmem:[#allocation1 + $0x10] sm:$0xff pattern:$0x73625140]
    %v99 = vld.sshfl [vmem:[#allocation1 + $0x18] sm:$0xff pattern:$0x73625140]
    %v100 = vld.sshfl [vmem:[#allocation1 + $0x20] sm:$0xff pattern:$0x73625140]
    %v101 = vld.sshfl [vmem:[#allocation1 + $0x28] sm:$0xff pattern:$0x73625140]
    %v102 = vld.sshfl [vmem:[#allocation1 + $0x30] sm:$0xff pattern:$0x73625140]
    %v103 = vld.sshfl [vmem:[#allocation1 + $0x38] sm:$0xff pattern:$0x73625140]
    %v112 = vmul.f32 %v89, %v96
    %v113 = vmul.f32 %v89, %v97
    %v114 = vmul.f32 %v89, %v98
    %v115 = vmul.f32 %v89, %v99
    %v116 = vmul.f32 %v89, %v100
    %v117 = vmul.f32 %v89, %v101
    %v118 = vmul.f32 %v89, %v102
    %v119 = vmul.f32 %v89, %v103
    %v120 = vadd.f32 %v75, %v112
    %v121 = vadd.f32 %v76, %v113
    %v122 = vadd.f32 %v77, %v114
    %v123 = vadd.f32 %v78, %v115
    %v124 = vadd.f32 %v79, %v116
    %v125 = vadd.f32 %v80, %v117
    %v126 = vadd.f32 %v81, %v118
    %v127 = vadd.f32 %v82, %v119
    %v136 = vrot.slane %v121, 6
    %v137 = vrot.slane %v122, 4
    %v138 = vrot.slane %v123, 2
    %v139 = vrot.slane %v125, 6
    %v140 = vrot.slane %v126, 4
    %v141 = vrot.slane %v127, 2
    %vm142 = vcmask 1041408
    %v143 = vsel %vm142, %v120, %v136
    %vm144 = vcmask 1045508
    %v145 = vsel %vm144, %v137, %v138
    %vm146 = vcmask 1043456
    %v147 = vsel %vm146, %v143, %v145
    %v148 = vsel %vm142, %v124, %v139
    %v149 = vsel %vm144, %v140, %v141
    %v150 = vsel %vm146, %v148, %v149
    %153 = vst [vmem:[#allocation7] sm:$0xff] %v147
    %154 = vst [vmem:[#allocation7 + $0x8] sm:$0xff] %v150
    // Predicated region
    $region26: #{tpu_custom_call.1} parent=1 // pred_check
      _
    $region27: #{tpu_custom_call.1} parent=1 // pred_check_branch
      %156 = sbr.rel (0) target = $region29
    $region28: #{tpu_custom_call.1} parent=1 // pred_region
      %158 = vsyncadd [#allocation4], 0
      %s160 = sshll.u32 [#allocation7], 4
      %s161 = int_to_ptr.vmem [resolvable:$true] %s160
      %s162 = sshll.u32 %s4, 4
      %s163 = int_to_ptr.hbm [resolvable:$true] %s162
      %165 = dma.vmem_to_hbm [thread:$0]  %s161, 256, %s163, [#allocation4]
    $region29: #{tpu_custom_call.1} parent=1 // pred_fallthru
      _
    // Predicated region
    $region30: #{tpu_custom_call.1} parent=1 // pred_check
      _
    $region31: #{tpu_custom_call.1} parent=1 // pred_check_branch
      %167 = sbr.rel (0) target = $region33
    $region32: #{tpu_custom_call.1} parent=1 // pred_region
      %169 = dma.done [#allocation4], 256
    $region33: #{tpu_custom_call.1} parent=1 // pred_fallthru
      _
    %170 = vsyncpa [#allocation3], 1
    %171 = vsyncpa [#allocation6], 1
    %172 = vsyncpa [#allocation4], 1

</llo_original>
